<compile_context>
chip_gen: v7x
topology: tpu7x:2x2x1
jax: 0.10.0
libtpu: 0.0.40
codegen_flags: <defaults>
</compile_context>

<pallas_src>
import jax
import jax.numpy as jnp
from jax.experimental import pallas as pl
from jax.experimental.pallas import tpu as pltpu


def mlp_kernel(x_ref, w1_ref, b1_ref, w2_ref, b2_ref, w3_ref, b3_ref, o_ref):
    x = x_ref[...]

    # torch.nn.functional.normalize(x, p=2, dim=1, eps=1e-12):
    #   x / max(||x||_2, eps)  ==  x * rsqrt(max(||x||^2, eps^2))
    ssq = jnp.sum(x * x, axis=1, keepdims=True)
    xn = x * jax.lax.rsqrt(jnp.maximum(ssq, 1e-24))

    h1 = jnp.dot(xn, w1_ref[...], preferred_element_type=jnp.float32) + b1_ref[...]
    h1 = jnp.maximum(h1, 0.0)

    h2 = jnp.dot(h1, w2_ref[...], preferred_element_type=jnp.float32) + b2_ref[...]
    h2 = jnp.maximum(h2, 0.0)

    o_ref[...] = (
        jnp.dot(h2, w3_ref[...], preferred_element_type=jnp.float32) + b3_ref[...]
    )


def _round_up(n, m):
    return ((n + m - 1) // m) * m


def _pick_batch_tile(batch, d_in_p, h_p, a_p, vmem_budget_bytes=24 * 1024 * 1024):
    """Largest batch tile (multiple of 8, <=512) fitting a conservative VMEM budget."""
    # Weights/biases: assume double-buffered allocation (worst case).
    fixed = 2 * 4 * (d_in_p * h_p + h_p * h_p + h_p * a_p + 2 * h_p + a_p)
    # Per batch row: x tile + out tile (double-buffered) + two hidden activations.
    per_row = 2 * 4 * (d_in_p + a_p) + 4 * (2 * h_p)
    avail = max(vmem_budget_bytes - fixed, 0)
    tile = (avail // per_row // 8) * 8 if per_row > 0 else 512
    tile = int(min(max(tile, 8), 512))
    # No point tiling beyond the (padded) batch itself.
    return min(tile, _round_up(max(batch, 8), 8))


def mlp_forward(x, w1, b1, w2, b2, w3, b3):
    batch, d_in = x.shape
    n_hidden = w1.shape[1]
    n_actions = w3.shape[1]

    # Pad feature dims to lane multiples (128) -> lane-dense loads/stores.
    d_in_p = _round_up(d_in, 128)
    h_p = _round_up(n_hidden, 128)
    a_p = _round_up(n_actions, 128)

    tile_b = _pick_batch_tile(batch, d_in_p, h_p, a_p)
    batch_p = _round_up(max(batch, 8), tile_b)

    f32 = jnp.float32
    xp = jnp.zeros((batch_p, d_in_p), f32).at[:batch, :d_in].set(x.astype(f32))
    w1p = jnp.zeros((d_in_p, h_p), f32).at[:d_in, :n_hidden].set(w1)
    b1p = jnp.zeros((1, h_p), f32).at[:, :n_hidden].set(b1.reshape(1, -1))
    w2p = jnp.zeros((h_p, h_p), f32).at[:n_hidden, :n_hidden].set(w2)
    b2p = jnp.zeros((1, h_p), f32).at[:, :n_hidden].set(b2.reshape(1, -1))
    w3p = jnp.zeros((h_p, a_p), f32).at[:n_hidden, :n_actions].set(w3)
    b3p = jnp.zeros((1, a_p), f32).at[:, :n_actions].set(b3.reshape(1, -1))

    grid = (batch_p // tile_b,)

    flops = 2 * batch_p * (d_in_p * h_p + h_p * h_p + h_p * a_p)
    bytes_accessed = 4 * (
        batch_p * d_in_p                            # x in
        + batch_p * a_p                             # out
        + d_in_p * h_p + h_p * h_p + h_p * a_p      # weights
        + 2 * h_p + a_p                             # biases
    )

    out = pl.pallas_call(
        mlp_kernel,
        out_shape=jax.ShapeDtypeStruct((batch_p, a_p), jnp.float32),
        grid=grid,
        in_specs=[
            # x: streamed per batch tile.
            pl.BlockSpec((tile_b, d_in_p), lambda i: (i, 0)),
            # weights / biases: constant block index -> fetched once, VMEM-resident.
            pl.BlockSpec((d_in_p, h_p), lambda i: (0, 0)),
            pl.BlockSpec((1, h_p), lambda i: (0, 0)),
            pl.BlockSpec((h_p, h_p), lambda i: (0, 0)),
            pl.BlockSpec((1, h_p), lambda i: (0, 0)),
            pl.BlockSpec((h_p, a_p), lambda i: (0, 0)),
            pl.BlockSpec((1, a_p), lambda i: (0, 0)),
        ],
        out_specs=pl.BlockSpec((tile_b, a_p), lambda i: (i, 0)),
        compiler_params=pltpu.CompilerParams(
            dimension_semantics=("parallel",),
        ),
        cost_estimate=pl.CostEstimate(
            flops=flops,
            transcendentals=batch_p,
            bytes_accessed=bytes_accessed,
        ),
    )(xp, w1p, b1p, w2p, b2p, w3p, b3p)

    return out[:batch, :n_actions]


def init_params(key, n_state_dims, n_hidden, n_actions):
    """Deterministic init mimicking nn.Linear's U(-1/sqrt(fan_in), 1/sqrt(fan_in))."""
    ks = jax.random.split(key, 6)

    def linear(kw, kb, fan_in, fan_out):
        bound = 1.0 / jnp.sqrt(fan_in)
        w = jax.random.uniform(kw, (fan_in, fan_out), jnp.float32, -bound, bound)
        b = jax.random.uniform(kb, (1, fan_out), jnp.float32, -bound, bound)
        return w, b

    w1, b1 = linear(ks[0], ks[1], n_state_dims, n_hidden)
    w2, b2 = linear(ks[2], ks[3], n_hidden, n_hidden)
    w3, b3 = linear(ks[4], ks[5], n_hidden, n_actions)
    return w1, b1, w2, b2, w3, b3


def mlp_reference(x, w1, b1, w2, b2, w3, b3):
    norm = jnp.sqrt(jnp.sum(x * x, axis=1, keepdims=True))
    xn = x / jnp.maximum(norm, 1e-12)
    h1 = jnp.maximum(xn @ w1 + b1, 0.0)
    h2 = jnp.maximum(h1 @ w2 + b2, 0.0)
    return h2 @ w3 + b3


if __name__ == "__main__":
    n_state_dims, n_hidden, n_actions = 16, 32, 4
    batch = 8

    key = jax.random.PRNGKey(0)
    kx, kp = jax.random.split(key)

    x = jax.random.normal(kx, (batch, n_state_dims), dtype=jnp.float32)
    params = init_params(kp, n_state_dims, n_hidden, n_actions)

    out = mlp_forward(x, *params)
    out = jax.block_until_ready(out)

    ref = mlp_reference(x, *params)
    assert out.shape == (batch, n_actions)
    assert jnp.allclose(out, ref, atol=1e-5, rtol=1e-5), (
        jnp.max(jnp.abs(out - ref))
    )

    print("KERNEL_OK")
</pallas_src>

<mosaic_0001>
module attributes {stable_mosaic.version = 11 : i64} {
  func.func @mlp_kernel(%arg0: i32, %arg1: memref<8x128xf32, #tpu.memory_space<vmem>>, %arg2: memref<128x128xf32, #tpu.memory_space<vmem>>, %arg3: memref<1x128xf32, #tpu.memory_space<vmem>>, %arg4: memref<128x128xf32, #tpu.memory_space<vmem>>, %arg5: memref<1x128xf32, #tpu.memory_space<vmem>>, %arg6: memref<128x128xf32, #tpu.memory_space<vmem>>, %arg7: memref<1x128xf32, #tpu.memory_space<vmem>>, %arg8: memref<8x128xf32, #tpu.memory_space<vmem>>) attributes {dimension_semantics = [#tpu.dimension_semantics<parallel>], iteration_bounds = array<i64: 1>, scalar_prefetch = 0 : i64, scratch_operands = 0 : i64, tpu.core_type = #tpu.core_type<tc>, window_params = [{transform_indices = @transform_0, window_bounds = array<i64: 8, 128>}, {pipeline_mode = #tpu.pipeline_mode<synchronous>, transform_indices = @transform_1, window_bounds = array<i64: 128, 128>}, {pipeline_mode = #tpu.pipeline_mode<synchronous>, transform_indices = @transform_2, window_bounds = array<i64: 1, 128>}, {pipeline_mode = #tpu.pipeline_mode<synchronous>, transform_indices = @transform_3, window_bounds = array<i64: 128, 128>}, {pipeline_mode = #tpu.pipeline_mode<synchronous>, transform_indices = @transform_4, window_bounds = array<i64: 1, 128>}, {pipeline_mode = #tpu.pipeline_mode<synchronous>, transform_indices = @transform_5, window_bounds = array<i64: 128, 128>}, {pipeline_mode = #tpu.pipeline_mode<synchronous>, transform_indices = @transform_6, window_bounds = array<i64: 1, 128>}, {transform_indices = @transform_7, window_bounds = array<i64: 8, 128>}]} {
    %c0 = arith.constant 0 : index
    %c0_0 = arith.constant 0 : index
    %0 = vector.load %arg1[%c0, %c0_0] : memref<8x128xf32, #tpu.memory_space<vmem>>, vector<8x128xf32>
    %1 = arith.mulf %0, %0 : vector<8x128xf32>
    %cst = arith.constant dense<0.000000e+00> : vector<8xf32>
    %2 = vector.multi_reduction <add>, %1, %cst [1] : vector<8x128xf32> to vector<8xf32>
    %3 = vector.shape_cast %2 : vector<8xf32> to vector<8x1xf32>
    %cst_1 = arith.constant 1.000000e-24 : f32
    %4 = vector.broadcast %cst_1 : f32 to vector<8x1xf32>
    %5 = arith.maximumf %3, %4 : vector<8x1xf32>
    %6 = math.rsqrt %5 : vector<8x1xf32>
    %7 = vector.broadcast %6 : vector<8x1xf32> to vector<8x128xf32>
    %8 = arith.mulf %0, %7 : vector<8x128xf32>
    %c0_2 = arith.constant 0 : index
    %c0_3 = arith.constant 0 : index
    %9 = vector.load %arg2[%c0_2, %c0_3] : memref<128x128xf32, #tpu.memory_space<vmem>>, vector<128x128xf32>
    %cst_4 = arith.constant dense<0.000000e+00> : vector<8x128xf32>
    %10 = tpu.matmul %8, %9, %cst_4 {dimension_numbers = #tpu.dot_dimension_numbers<[1], [0], [0], [1], [0, 0, 1, 1], [], []>} : vector<8x128xf32>, vector<128x128xf32>, vector<8x128xf32> -> vector<8x128xf32>
    %c0_5 = arith.constant 0 : index
    %c0_6 = arith.constant 0 : index
    %11 = vector.load %arg3[%c0_5, %c0_6] : memref<1x128xf32, #tpu.memory_space<vmem>>, vector<1x128xf32>
    %12 = vector.broadcast %11 : vector<1x128xf32> to vector<8x128xf32>
    %13 = arith.addf %10, %12 : vector<8x128xf32>
    %cst_7 = arith.constant 0.000000e+00 : f32
    %14 = vector.broadcast %cst_7 : f32 to vector<8x128xf32>
    %15 = arith.maximumf %13, %14 : vector<8x128xf32>
    %c0_8 = arith.constant 0 : index
    %c0_9 = arith.constant 0 : index
    %16 = vector.load %arg4[%c0_8, %c0_9] : memref<128x128xf32, #tpu.memory_space<vmem>>, vector<128x128xf32>
    %cst_10 = arith.constant dense<0.000000e+00> : vector<8x128xf32>
    %17 = tpu.matmul %15, %16, %cst_10 {dimension_numbers = #tpu.dot_dimension_numbers<[1], [0], [0], [1], [0, 0, 1, 1], [], []>} : vector<8x128xf32>, vector<128x128xf32>, vector<8x128xf32> -> vector<8x128xf32>
    %c0_11 = arith.constant 0 : index
    %c0_12 = arith.constant 0 : index
    %18 = vector.load %arg5[%c0_11, %c0_12] : memref<1x128xf32, #tpu.memory_space<vmem>>, vector<1x128xf32>
    %19 = vector.broadcast %18 : vector<1x128xf32> to vector<8x128xf32>
    %20 = arith.addf %17, %19 : vector<8x128xf32>
    %cst_13 = arith.constant 0.000000e+00 : f32
    %21 = vector.broadcast %cst_13 : f32 to vector<8x128xf32>
    %22 = arith.maximumf %20, %21 : vector<8x128xf32>
    %c0_14 = arith.constant 0 : index
    %c0_15 = arith.constant 0 : index
    %23 = vector.load %arg6[%c0_14, %c0_15] : memref<128x128xf32, #tpu.memory_space<vmem>>, vector<128x128xf32>
    %cst_16 = arith.constant dense<0.000000e+00> : vector<8x128xf32>
    %24 = tpu.matmul %22, %23, %cst_16 {dimension_numbers = #tpu.dot_dimension_numbers<[1], [0], [0], [1], [0, 0, 1, 1], [], []>} : vector<8x128xf32>, vector<128x128xf32>, vector<8x128xf32> -> vector<8x128xf32>
    %c0_17 = arith.constant 0 : index
    %c0_18 = arith.constant 0 : index
    %25 = vector.load %arg7[%c0_17, %c0_18] : memref<1x128xf32, #tpu.memory_space<vmem>>, vector<1x128xf32>
    %26 = vector.broadcast %25 : vector<1x128xf32> to vector<8x128xf32>
    %27 = arith.addf %24, %26 : vector<8x128xf32>
    %c0_19 = arith.constant 0 : index
    %c0_20 = arith.constant 0 : index
    %28 = vector.load %arg8[%c0_19, %c0_20] : memref<8x128xf32, #tpu.memory_space<vmem>>, vector<8x128xf32>
    tpu.vector_store %arg8[%c0_19, %c0_20], %27 {strides = array<i32>} : memref<8x128xf32, #tpu.memory_space<vmem>>, vector<8x128xf32>,
    return
  }
  func.func @transform_0(%arg0: i32) -> (i32, i32) {
    %c0_i32 = arith.constant 0 : i32
    %c0_i32_0 = arith.constant 0 : i32
    return %arg0, %c0_i32 : i32, i32
  }
  func.func @transform_1(%arg0: i32) -> (i32, i32) {
    %c0_i32 = arith.constant 0 : i32
    %c0_i32_0 = arith.constant 0 : i32
    %c0_i32_1 = arith.constant 0 : i32
    return %c0_i32, %c0_i32_0 : i32, i32
  }
  func.func @transform_2(%arg0: i32) -> (i32, i32) {
    %c0_i32 = arith.constant 0 : i32
    %c0_i32_0 = arith.constant 0 : i32
    %c0_i32_1 = arith.constant 0 : i32
    return %c0_i32, %c0_i32_0 : i32, i32
  }
  func.func @transform_3(%arg0: i32) -> (i32, i32) {
    %c0_i32 = arith.constant 0 : i32
    %c0_i32_0 = arith.constant 0 : i32
    %c0_i32_1 = arith.constant 0 : i32
    return %c0_i32, %c0_i32_0 : i32, i32
  }
  func.func @transform_4(%arg0: i32) -> (i32, i32) {
    %c0_i32 = arith.constant 0 : i32
    %c0_i32_0 = arith.constant 0 : i32
    %c0_i32_1 = arith.constant 0 : i32
    return %c0_i32, %c0_i32_0 : i32, i32
  }
  func.func @transform_5(%arg0: i32) -> (i32, i32) {
    %c0_i32 = arith.constant 0 : i32
    %c0_i32_0 = arith.constant 0 : i32
    %c0_i32_1 = arith.constant 0 : i32
    return %c0_i32, %c0_i32_0 : i32, i32
  }
  func.func @transform_6(%arg0: i32) -> (i32, i32) {
    %c0_i32 = arith.constant 0 : i32
    %c0_i32_0 = arith.constant 0 : i32
    %c0_i32_1 = arith.constant 0 : i32
    return %c0_i32, %c0_i32_0 : i32, i32
  }
  func.func @transform_7(%arg0: i32) -> (i32, i32) {
    %c0_i32 = arith.constant 0 : i32
    %c0_i32_0 = arith.constant 0 : i32
    return %arg0, %c0_i32 : i32, i32
  }
}

</mosaic_0001>

<llo_original>
// kernel: tpu_custom_call.1
$region0: #{tpu_custom_call.1}
  #allocation0 [shape = 'u32[]', space=smem, size = 0x4, offset = 0x4, fixed_abs, tag = 'smem constant byte address 0x4 - core index']
  #allocation1 [shape = 'u32[144,128]{1,0:T(1,128)}', space=vmem, size = 0x12000, scoped, tag = 'internal scratch']
  %s0 = inlined_call_operand.hbm [shape: f32[8,128], index: 0, kind: input, shape index: {}]
  %s1 = inlined_call_operand.hbm [shape: f32[128,128], index: 1, kind: input, shape index: {}]
  %s2 = inlined_call_operand.vmem [shape: f32[1,128], index: 2, kind: input, shape index: {}]
  %s3 = inlined_call_operand.hbm [shape: f32[128,128], index: 3, kind: input, shape index: {}]
  %s4 = inlined_call_operand.vmem [shape: f32[1,128], index: 4, kind: input, shape index: {}]
  %s5 = inlined_call_operand.hbm [shape: f32[128,128], index: 5, kind: input, shape index: {}]
  %s6 = inlined_call_operand.vmem [shape: f32[1,128], index: 6, kind: input, shape index: {}]
  %s7 = inlined_call_operand.hbm [shape: f32[8,128], index: 7, kind: output, shape index: {}]
  %s8 = sld [smem:[#allocation0]]
  $region54: #{tpu_custom_call.1} parent=0
    _
  %s10 = ssub.s32 1, %s8
  %s11 = scalar_select 0, %s10, %s8
  $region1: #{tpu_custom_call.1} parent=0
    #allocation2 [shape = 'u8[4096]{0}', space=vmem, size = 0x1000, scoped, tag = 'input window, operand 0, single buffered']
    #allocation3 [shape = 's32[1]{0}', space=sflag, size = 0x4, scoped, tag = 'scoped memory for tpu_custom_call.1']
    #allocation4 [shape = 's32[1]{0}', space=sflag, size = 0x4, scoped, tag = 'scoped memory for tpu_custom_call.1']
    #allocation5 [shape = 'u8[65536]{0}', space=vmem, size = 0x10000, scoped, tag = 'input window, operand 1, single buffered']
    #allocation6 [shape = 's32[1]{0}', space=sflag, size = 0x4, scoped, tag = 'scoped memory for tpu_custom_call.1']
    #allocation7 [shape = 'u8[65536]{0}', space=vmem, size = 0x10000, scoped, tag = 'input window, operand 3, single buffered']
    #allocation8 [shape = 'u8[65536]{0}', space=vmem, size = 0x10000, scoped, tag = 'input window, operand 5, single buffered']
    #allocation9 [shape = 's32[1]{0}', space=sflag, size = 0x4, scoped, tag = 'scoped memory for tpu_custom_call.1']
    #allocation10 [shape = 'u8[4096]{0}', space=vmem, size = 0x1000, scoped, tag = 'output window, operand 0, single buffered']
    %12 = vsyncpa [#allocation3], 0
    %13 = vsyncpa [#allocation6], 0
    %14 = vsyncpa [#allocation9], 0
    %15 = vsyncpa [#allocation4], 0
    // Predicated region
    $region2: #{tpu_custom_call.1} parent=1 // pred_check
      _
    $region3: #{tpu_custom_call.1} parent=1 // pred_check_branch
      %17 = sbr.rel (0) target = $region5
    $region4: #{tpu_custom_call.1} parent=1 // pred_region
      %s19 = ssub.s32 128, 128
      %20 = vsyncadd [#allocation3], %s19
      %s22 = sshll.u32 [#allocation2], 4
      %s23 = int_to_ptr.vmem [resolvable:$true] %s22
      %25 = dma.hbm_to_vmem [thread:$0]  %s0, 128, %s23, [#allocation3]
    $region5: #{tpu_custom_call.1} parent=1 // pred_fallthru
      _
    // Predicated region
    $region6: #{tpu_custom_call.1} parent=1 // pred_check
      _
    $region7: #{tpu_custom_call.1} parent=1 // pred_check_branch
      %27 = sbr.rel (0) target = $region9
    $region8: #{tpu_custom_call.1} parent=1 // pred_region
      %s29 = ssub.s32 2048, 2048
      %30 = vsyncadd [#allocation6], %s29
      %s31 = sshll.u32 [#allocation5], 4
      %s32 = int_to_ptr.vmem [resolvable:$true] %s31
      %37 = dma.hbm_to_vmem [thread:$0]  %s1, 2048, %s32, [#allocation6], 128, 128, 8
    $region9: #{tpu_custom_call.1} parent=1 // pred_fallthru
      _
    // Predicated region
    $region10: #{tpu_custom_call.1} parent=1 // pred_check
      _
    $region11: #{tpu_custom_call.1} parent=1 // pred_check_branch
      %39 = sbr.rel (0) target = $region13
    $region12: #{tpu_custom_call.1} parent=1 // pred_region
      _
    $region13: #{tpu_custom_call.1} parent=1 // pred_fallthru
      _
    // Predicated region
    $region14: #{tpu_custom_call.1} parent=1 // pred_check
      _
    $region15: #{tpu_custom_call.1} parent=1 // pred_check_branch
      %41 = sbr.rel (0) target = $region17
    $region16: #{tpu_custom_call.1} parent=1 // pred_region
      %s43 = ssub.s32 2048, 2048
      %44 = vsyncadd [#allocation6], %s43
      %s45 = sshll.u32 [#allocation7], 4
      %s46 = int_to_ptr.vmem [resolvable:$true] %s45
      %51 = dma.hbm_to_vmem [thread:$0]  %s3, 2048, %s46, [#allocation6], 128, 128, 8
    $region17: #{tpu_custom_call.1} parent=1 // pred_fallthru
      _
    // Predicated region
    $region18: #{tpu_custom_call.1} parent=1 // pred_check
      _
    $region19: #{tpu_custom_call.1} parent=1 // pred_check_branch
      %53 = sbr.rel (0) target = $region21
    $region20: #{tpu_custom_call.1} parent=1 // pred_region
      _
    $region21: #{tpu_custom_call.1} parent=1 // pred_fallthru
      _
    // Predicated region
    $region22: #{tpu_custom_call.1} parent=1 // pred_check
      _
    $region23: #{tpu_custom_call.1} parent=1 // pred_check_branch
      %55 = sbr.rel (0) target = $region25
    $region24: #{tpu_custom_call.1} parent=1 // pred_region
      %s57 = ssub.s32 2048, 2048
      %58 = vsyncadd [#allocation9], %s57
      %s59 = sshll.u32 [#allocation8], 4
      %s60 = int_to_ptr.vmem [resolvable:$true] %s59
      %65 = dma.hbm_to_vmem [thread:$0]  %s5, 2048, %s60, [#allocation9], 128, 128, 8
    $region25: #{tpu_custom_call.1} parent=1 // pred_fallthru
      _
    // Predicated region
    $region26: #{tpu_custom_call.1} parent=1 // pred_check
      _
    $region27: #{tpu_custom_call.1} parent=1 // pred_check_branch
      %67 = sbr.rel (0) target = $region29
    $region28: #{tpu_custom_call.1} parent=1 // pred_region
      _
    $region29: #{tpu_custom_call.1} parent=1 // pred_fallthru
      _
    // Predicated region
    $region30: #{tpu_custom_call.1} parent=1 // pred_check
      _
    $region31: #{tpu_custom_call.1} parent=1 // pred_check_branch
      %69 = sbr.rel (0) target = $region33
    $region32: #{tpu_custom_call.1} parent=1 // pred_region
      %70 = dma.done [#allocation3], 128
    $region33: #{tpu_custom_call.1} parent=1 // pred_fallthru
      _
    // Predicated region
    $region34: #{tpu_custom_call.1} parent=1 // pred_check
      _
    $region35: #{tpu_custom_call.1} parent=1 // pred_check_branch
      %72 = sbr.rel (0) target = $region37
    $region36: #{tpu_custom_call.1} parent=1 // pred_region
      %73 = dma.done [#allocation6], 2048
    $region37: #{tpu_custom_call.1} parent=1 // pred_fallthru
      _
    // Predicated region
    $region38: #{tpu_custom_call.1} parent=1 // pred_check
      _
    $region39: #{tpu_custom_call.1} parent=1 // pred_check_branch
      %75 = sbr.rel (0) target = $region41
    $region40: #{tpu_custom_call.1} parent=1 // pred_region
      %76 = dma.done [#allocation6], 2048
    $region41: #{tpu_custom_call.1} parent=1 // pred_fallthru
      _
    // Predicated region
    $region42: #{tpu_custom_call.1} parent=1 // pred_check
      _
    $region43: #{tpu_custom_call.1} parent=1 // pred_check_branch
      %78 = sbr.rel (0) target = $region45
    $region44: #{tpu_custom_call.1} parent=1 // pred_region
      %79 = dma.done [#allocation9], 2048
    $region45: #{tpu_custom_call.1} parent=1 // pred_fallthru
      _
    %v80 = vld [vmem:[#allocation2] sm:$0xff]
    %v81 = vmul.f32 %v80, %v80
    %82 = vadd.xlane.f32.xlu0 %v81
    %v83 = vpop.xlane.xlu0 %82
    %v84 = vmax.f32 %v83, 1e-24
    %v85 = vrsqrt.pop %v84
    %v86 = vmul.f32 %v80, %v85
    %v87 = vld [vmem:[#allocation5] sm:$0xff]
    %v88 = vld [vmem:[#allocation5 + $0x8] sm:$0xff]
    %v89 = vld [vmem:[#allocation5 + $0x10] sm:$0xff]
    %v90 = vld [vmem:[#allocation5 + $0x18] sm:$0xff]
    %v91 = vld [vmem:[#allocation5 + $0x20] sm:$0xff]
    %v92 = vld [vmem:[#allocation5 + $0x28] sm:$0xff]
    %v93 = vld [vmem:[#allocation5 + $0x30] sm:$0xff]
    %v94 = vld [vmem:[#allocation5 + $0x38] sm:$0xff]
    %v95 = vld [vmem:[#allocation5 + $0x40] sm:$0xff]
    %v96 = vld [vmem:[#allocation5 + $0x48] sm:$0xff]
    %v97 = vld [vmem:[#allocation5 + $0x50] sm:$0xff]
    %v98 = vld [vmem:[#allocation5 + $0x58] sm:$0xff]
    %v99 = vld [vmem:[#allocation5 + $0x60] sm:$0xff]
    %v100 = vld [vmem:[#allocation5 + $0x68] sm:$0xff]
    %v101 = vld [vmem:[#allocation5 + $0x70] sm:$0xff]
    %v102 = vld [vmem:[#allocation5 + $0x78] sm:$0xff]
    %v103 = vld [vmem:[%s2] sm:$0x1]
    %v105 = vlaneseq
    %v106 = vshrl.u32 %v105, 7
    %v107 = vsub.s32 0, %v106
    %v108 = vrot.slane %v103, %v107
    %110 = vmatprep.subr.mxu0 0.0
    %111 = vmatpush1.msra.mxu0 %v87
    %112 = vmatprep.subr.mxu0 0.0
    %113 = vmatpush1.msra.mxu0 %v88
    %114 = vmatprep.subr.mxu0 0.0
    %115 = vmatpush1.msra.mxu0 %v89
    %116 = vmatprep.subr.mxu0 0.0
    %117 = vmatpush1.msra.mxu0 %v90
    %118 = vmatprep.subr.mxu0 0.0
    %119 = vmatpush1.msra.mxu0 %v91
    %120 = vmatprep.subr.mxu0 0.0
    %121 = vmatpush1.msra.mxu0 %v92
    %122 = vmatprep.subr.mxu0 0.0
    %123 = vmatpush1.msra.mxu0 %v93
    %124 = vmatprep.subr.mxu0 0.0
    %125 = vmatpush1.msra.mxu0 %v94
    %126 = vmatprep.subr.mxu0 0.0
    %127 = vmatpush1.msra.mxu0 %v95
    %128 = vmatprep.subr.mxu0 0.0
    %129 = vmatpush1.msra.mxu0 %v96
    %130 = vmatprep.subr.mxu0 0.0
    %131 = vmatpush1.msra.mxu0 %v97
    %132 = vmatprep.subr.mxu0 0.0
    %133 = vmatpush1.msra.mxu0 %v98
    %134 = vmatprep.subr.mxu0 0.0
    %135 = vmatpush1.msra.mxu0 %v99
    %136 = vmatprep.subr.mxu0 0.0
    %137 = vmatpush1.msra.mxu0 %v100
    %138 = vmatprep.subr.mxu0 0.0
    %139 = vmatpush1.msra.mxu0 %v101
    %140 = vmatprep.subr.mxu0 0.0
    %141 = vmatpush1.msra.mxu0 %v102
    %142 = vmatprep.subr.mxu0 0.0
    %143 = vmatpush1.msra.mxu0 0.0
    %144 = vmatprep.subr.mxu0 0.0
    %145 = vmatpush1.msra.mxu0 0.0
    %146 = vmatprep.subr.mxu0 0.0
    %147 = vmatpush1.msra.mxu0 0.0
    %148 = vmatprep.subr.mxu0 0.0
    %149 = vmatpush1.msra.mxu0 0.0
    %150 = vmatprep.subr.mxu0 0.0
    %151 = vmatpush1.msra.mxu0 0.0
    %152 = vmatprep.subr.mxu0 0.0
    %153 = vmatpush1.msra.mxu0 0.0
    %154 = vmatprep.subr.mxu0 0.0
    %155 = vmatpush1.msra.mxu0 0.0
    %156 = vmatprep.subr.mxu0 0.0
    %157 = vmatpush1.msra.mxu0 0.0
    %158 = vmatprep.subr.mxu0 0.0
    %159 = vmatpush1.msra.mxu0 0.0
    %160 = vmatprep.subr.mxu0 0.0
    %161 = vmatpush1.msra.mxu0 0.0
    %162 = vmatprep.subr.mxu0 0.0
    %163 = vmatpush1.msra.mxu0 0.0
    %164 = vmatprep.subr.mxu0 0.0
    %165 = vmatpush1.msra.mxu0 0.0
    %166 = vmatprep.subr.mxu0 0.0
    %167 = vmatpush1.msra.mxu0 0.0
    %168 = vmatprep.subr.mxu0 0.0
    %169 = vmatpush1.msra.mxu0 0.0
    %170 = vmatprep.subr.mxu0 0.0
    %171 = vmatpush1.msra.mxu0 0.0
    %172 = vmatprep.subr.mxu0 0.0
    %173 = vmatpush1.msra.mxu0 0.0
    %174 = vmatprep.mubr.f32.mxu0 0.0
    %175 = vmatmul.mubr.f32.gmra.mrb[0].mxu0 %v86
    %v176 = vpop.f32.mrb[0].mxu0
    %v177 = vadd.f32 %v108, %v176
    %v178 = vpop.f32.mrb[0].mxu0
    %179 = vdwg.mxu0
    %v180 = vmax.f32 %v177, 0.0
    %v181 = vld [vmem:[#allocation7] sm:$0xff]
    %v182 = vld [vmem:[#allocation7 + $0x8] sm:$0xff]
    %v183 = vld [vmem:[#allocation7 + $0x10] sm:$0xff]
    %v184 = vld [vmem:[#allocation7 + $0x18] sm:$0xff]
    %v185 = vld [vmem:[#allocation7 + $0x20] sm:$0xff]
    %v186 = vld [vmem:[#allocation7 + $0x28] sm:$0xff]
    %v187 = vld [vmem:[#allocation7 + $0x30] sm:$0xff]
    %v188 = vld [vmem:[#allocation7 + $0x38] sm:$0xff]
    %v189 = vld [vmem:[#allocation7 + $0x40] sm:$0xff]
    %v190 = vld [vmem:[#allocation7 + $0x48] sm:$0xff]
    %v191 = vld [vmem:[#allocation7 + $0x50] sm:$0xff]
    %v192 = vld [vmem:[#allocation7 + $0x58] sm:$0xff]
    %v193 = vld [vmem:[#allocation7 + $0x60] sm:$0xff]
    %v194 = vld [vmem:[#allocation7 + $0x68] sm:$0xff]
    %v195 = vld [vmem:[#allocation7 + $0x70] sm:$0xff]
    %v196 = vld [vmem:[#allocation7 + $0x78] sm:$0xff]
    %v197 = vld [vmem:[%s4] sm:$0x1]
    %v199 = vlaneseq
    %v200 = vshrl.u32 %v199, 7
    %v201 = vsub.s32 0, %v200
    %v202 = vrot.slane %v197, %v201
    %204 = vmatprep.subr.mxu0 0.0
    %205 = vmatpush1.msra.mxu0 %v181
    %206 = vmatprep.subr.mxu0 0.0
    %207 = vmatpush1.msra.mxu0 %v182
    %208 = vmatprep.subr.mxu0 0.0
    %209 = vmatpush1.msra.mxu0 %v183
    %210 = vmatprep.subr.mxu0 0.0
    %211 = vmatpush1.msra.mxu0 %v184
    %212 = vmatprep.subr.mxu0 0.0
    %213 = vmatpush1.msra.mxu0 %v185
    %214 = vmatprep.subr.mxu0 0.0
    %215 = vmatpush1.msra.mxu0 %v186
    %216 = vmatprep.subr.mxu0 0.0
    %217 = vmatpush1.msra.mxu0 %v187
    %218 = vmatprep.subr.mxu0 0.0
    %219 = vmatpush1.msra.mxu0 %v188
    %220 = vmatprep.subr.mxu0 0.0
    %221 = vmatpush1.msra.mxu0 %v189
    %222 = vmatprep.subr.mxu0 0.0
    %223 = vmatpush1.msra.mxu0 %v190
    %224 = vmatprep.subr.mxu0 0.0
    %225 = vmatpush1.msra.mxu0 %v191
    %226 = vmatprep.subr.mxu0 0.0
    %227 = vmatpush1.msra.mxu0 %v192
    %228 = vmatprep.subr.mxu0 0.0
    %229 = vmatpush1.msra.mxu0 %v193
    %230 = vmatprep.subr.mxu0 0.0
    %231 = vmatpush1.msra.mxu0 %v194
    %232 = vmatprep.subr.mxu0 0.0
    %233 = vmatpush1.msra.mxu0 %v195
    %234 = vmatprep.subr.mxu0 0.0
    %235 = vmatpush1.msra.mxu0 %v196
    %236 = vmatprep.subr.mxu0 0.0
    %237 = vmatpush1.msra.mxu0 0.0
    %238 = vmatprep.subr.mxu0 0.0
    %239 = vmatpush1.msra.mxu0 0.0
    %240 = vmatprep.subr.mxu0 0.0
    %241 = vmatpush1.msra.mxu0 0.0
    %242 = vmatprep.subr.mxu0 0.0
    %243 = vmatpush1.msra.mxu0 0.0
    %244 = vmatprep.subr.mxu0 0.0
    %245 = vmatpush1.msra.mxu0 0.0
    %246 = vmatprep.subr.mxu0 0.0
    %247 = vmatpush1.msra.mxu0 0.0
    %248 = vmatprep.subr.mxu0 0.0
    %249 = vmatpush1.msra.mxu0 0.0
    %250 = vmatprep.subr.mxu0 0.0
    %251 = vmatpush1.msra.mxu0 0.0
    %252 = vmatprep.subr.mxu0 0.0
    %253 = vmatpush1.msra.mxu0 0.0
    %254 = vmatprep.subr.mxu0 0.0
    %255 = vmatpush1.msra.mxu0 0.0
    %256 = vmatprep.subr.mxu0 0.0
    %257 = vmatpush1.msra.mxu0 0.0
    %258 = vmatprep.subr.mxu0 0.0
    %259 = vmatpush1.msra.mxu0 0.0
    %260 = vmatprep.subr.mxu0 0.0
    %261 = vmatpush1.msra.mxu0 0.0
    %262 = vmatprep.subr.mxu0 0.0
    %263 = vmatpush1.msra.mxu0 0.0
    %264 = vmatprep.subr.mxu0 0.0
    %265 = vmatpush1.msra.mxu0 0.0
    %266 = vmatprep.subr.mxu0 0.0
    %267 = vmatpush1.msra.mxu0 0.0
    %268 = vmatprep.mubr.f32.mxu0 0.0
    %269 = vmatmul.mubr.f32.gmra.mrb[0].mxu0 %v180
    %v270 = vpop.f32.mrb[0].mxu0
    %v271 = vadd.f32 %v202, %v270
    %v272 = vpop.f32.mrb[0].mxu0
    %273 = vdwg.mxu0
    %v274 = vmax.f32 %v271, 0.0
    %v275 = vld [vmem:[#allocation8] sm:$0xff]
    %v276 = vld [vmem:[#allocation8 + $0x8] sm:$0xff]
    %v277 = vld [vmem:[#allocation8 + $0x10] sm:$0xff]
    %v278 = vld [vmem:[#allocation8 + $0x18] sm:$0xff]
    %v279 = vld [vmem:[#allocation8 + $0x20] sm:$0xff]
    %v280 = vld [vmem:[#allocation8 + $0x28] sm:$0xff]
    %v281 = vld [vmem:[#allocation8 + $0x30] sm:$0xff]
    %v282 = vld [vmem:[#allocation8 + $0x38] sm:$0xff]
    %v283 = vld [vmem:[#allocation8 + $0x40] sm:$0xff]
    %v284 = vld [vmem:[#allocation8 + $0x48] sm:$0xff]
    %v285 = vld [vmem:[#allocation8 + $0x50] sm:$0xff]
    %v286 = vld [vmem:[#allocation8 + $0x58] sm:$0xff]
    %v287 = vld [vmem:[#allocation8 + $0x60] sm:$0xff]
    %v288 = vld [vmem:[#allocation8 + $0x68] sm:$0xff]
    %v289 = vld [vmem:[#allocation8 + $0x70] sm:$0xff]
    %v290 = vld [vmem:[#allocation8 + $0x78] sm:$0xff]
    %v291 = vld [vmem:[%s6] sm:$0x1]
    %v293 = vlaneseq
    %v294 = vshrl.u32 %v293, 7
    %v295 = vsub.s32 0, %v294
    %v296 = vrot.slane %v291, %v295
    %298 = vmatprep.subr.mxu0 0.0
    %299 = vmatpush1.msra.mxu0 %v275
    %300 = vmatprep.subr.mxu0 0.0
    %301 = vmatpush1.msra.mxu0 %v276
    %302 = vmatprep.subr.mxu0 0.0
    %303 = vmatpush1.msra.mxu0 %v277
    %304 = vmatprep.subr.mxu0 0.0
    %305 = vmatpush1.msra.mxu0 %v278
    %306 = vmatprep.subr.mxu0 0.0
    %307 = vmatpush1.msra.mxu0 %v279
    %308 = vmatprep.subr.mxu0 0.0
    %309 = vmatpush1.msra.mxu0 %v280
    %310 = vmatprep.subr.mxu0 0.0
    %311 = vmatpush1.msra.mxu0 %v281
    %312 = vmatprep.subr.mxu0 0.0
    %313 = vmatpush1.msra.mxu0 %v282
    %314 = vmatprep.subr.mxu0 0.0
    %315 = vmatpush1.msra.mxu0 %v283
    %316 = vmatprep.subr.mxu0 0.0
    %317 = vmatpush1.msra.mxu0 %v284
    %318 = vmatprep.subr.mxu0 0.0
    %319 = vmatpush1.msra.mxu0 %v285
    %320 = vmatprep.subr.mxu0 0.0
    %321 = vmatpush1.msra.mxu0 %v286
    %322 = vmatprep.subr.mxu0 0.0
    %323 = vmatpush1.msra.mxu0 %v287
    %324 = vmatprep.subr.mxu0 0.0
    %325 = vmatpush1.msra.mxu0 %v288
    %326 = vmatprep.subr.mxu0 0.0
    %327 = vmatpush1.msra.mxu0 %v289
    %328 = vmatprep.subr.mxu0 0.0
    %329 = vmatpush1.msra.mxu0 %v290
    %330 = vmatprep.subr.mxu0 0.0
    %331 = vmatpush1.msra.mxu0 0.0
    %332 = vmatprep.subr.mxu0 0.0
    %333 = vmatpush1.msra.mxu0 0.0
    %334 = vmatprep.subr.mxu0 0.0
    %335 = vmatpush1.msra.mxu0 0.0
    %336 = vmatprep.subr.mxu0 0.0
    %337 = vmatpush1.msra.mxu0 0.0
    %338 = vmatprep.subr.mxu0 0.0
    %339 = vmatpush1.msra.mxu0 0.0
    %340 = vmatprep.subr.mxu0 0.0
    %341 = vmatpush1.msra.mxu0 0.0
    %342 = vmatprep.subr.mxu0 0.0
    %343 = vmatpush1.msra.mxu0 0.0
    %344 = vmatprep.subr.mxu0 0.0
    %345 = vmatpush1.msra.mxu0 0.0
    %346 = vmatprep.subr.mxu0 0.0
    %347 = vmatpush1.msra.mxu0 0.0
    %348 = vmatprep.subr.mxu0 0.0
    %349 = vmatpush1.msra.mxu0 0.0
    %350 = vmatprep.subr.mxu0 0.0
    %351 = vmatpush1.msra.mxu0 0.0
    %352 = vmatprep.subr.mxu0 0.0
    %353 = vmatpush1.msra.mxu0 0.0
    %354 = vmatprep.subr.mxu0 0.0
    %355 = vmatpush1.msra.mxu0 0.0
    %356 = vmatprep.subr.mxu0 0.0
    %357 = vmatpush1.msra.mxu0 0.0
    %358 = vmatprep.subr.mxu0 0.0
    %359 = vmatpush1.msra.mxu0 0.0
    %360 = vmatprep.subr.mxu0 0.0
    %361 = vmatpush1.msra.mxu0 0.0
    %362 = vmatprep.mubr.f32.mxu0 0.0
    %363 = vmatmul.mubr.f32.gmra.mrb[0].mxu0 %v274
    %v364 = vpop.f32.mrb[0].mxu0
    %v365 = vadd.f32 %v296, %v364
    %v366 = vpop.f32.mrb[0].mxu0
    %367 = vdwg.mxu0
    %368 = vst [vmem:[#allocation10] sm:$0xff] %v365
    // Predicated region
    $region46: #{tpu_custom_call.1} parent=1 // pred_check
      _
    $region47: #{tpu_custom_call.1} parent=1 // pred_check_branch
      %370 = sbr.rel (0) target = $region49
    $region48: #{tpu_custom_call.1} parent=1 // pred_region
      %s372 = ssub.s32 128, 128
      %373 = vsyncadd [#allocation4], %s372
      %s375 = sshll.u32 [#allocation10], 4
      %s376 = int_to_ptr.vmem [resolvable:$true] %s375
      %378 = dma.vmem_to_hbm [thread:$0]  %s376, 128, %s7, [#allocation4]
    $region49: #{tpu_custom_call.1} parent=1 // pred_fallthru
      _
    // Predicated region
    $region50: #{tpu_custom_call.1} parent=1 // pred_check
      _
    $region51: #{tpu_custom_call.1} parent=1 // pred_check_branch
      %380 = sbr.rel (0) target = $region53
    $region52: #{tpu_custom_call.1} parent=1 // pred_region
      %381 = dma.done [#allocation4], 128
    $region53: #{tpu_custom_call.1} parent=1 // pred_fallthru
      _
    %382 = vsyncpa [#allocation3], 1
    %383 = vsyncpa [#allocation6], 1
    %384 = vsyncpa [#allocation9], 1
    %385 = vsyncpa [#allocation4], 1

</llo_original>
